<compile_context>
chip_gen: v7x
topology: tpu7x:2x2x1
jax: 0.10.0
libtpu: 0.0.40
codegen_flags: <defaults>
</compile_context>

<pallas_src>
import functools
import math

import jax
import jax.numpy as jnp
from jax.experimental import pallas as pl
from jax.experimental.pallas import tpu as pltpu


# ----------------------------- Pallas kernel --------------------------------


def _transition_kernel(x_ref, scale_ref, shift_ref, w_ref, o_ref):
    """Fused BN(scale/shift) + ReLU + AvgPool(2) + 1x1x1 conv.

    x_ref:     (2*dt, H, Wg, K)    W-pair-packed NDHWC block (K = f*Cin)
    scale_ref: (1, K)              folded BatchNorm scale (per packed channel)
    shift_ref: (1, K)              folded BatchNorm shift
    w_ref:     (K, Nout)           block-diag [w; w]/8  (W-pool + conv fused)
    o_ref:     (dt, Ho, Wg, Nout)
    """
    d2, H, Wg, K = x_ref.shape
    dt, Ho = d2 // 2, H // 2
    n_out = o_ref.shape[-1]

    x = x_ref[...]
    # BatchNorm (folded) + ReLU on the VPU; scale/shift broadcast from (1, K).
    y = jnp.maximum(x * scale_ref[...] + shift_ref[...], 0.0)

    # 2x pooling over D and H: leading-dim reshapes + adds (cheap addressing).
    y = y.reshape(dt, 2, H, Wg, K)
    y = y[:, 0] + y[:, 1]                       # (dt, H, Wg, K)
    y = y.reshape(dt, Ho, 2, Wg, K)
    z = y[:, :, 0] + y[:, :, 1]                 # (dt, Ho, Wg, K)

    # W-pooling + 1x1x1 conv as one MXU matmul (1/8 pool scale folded into w).
    z2 = z.reshape(dt * Ho * Wg, K)
    out = jnp.dot(z2, w_ref[...], preferred_element_type=jnp.float32)
    o_ref[...] = out.reshape(dt, Ho, Wg, n_out).astype(o_ref.dtype)


# ----------------------------- tiling helpers --------------------------------


def _round_up(x, m):
    return (x + m - 1) // m * m


def _pick_lane_fold(W, Cin):
    # Fold whole 2-wide W-pooling pairs into the lane dim: improve lane density
    # while keeping >= 8 sublanes (W // f) and <= 128 lanes (f * Cin).
    f = 2
    while (2 * f) * Cin <= 128 and W % (2 * f) == 0 and W // (2 * f) >= 8:
        f *= 2
    return f


def _pick_dt(Do, H, Ho, Wg, K, Nout, budget_bytes=8 * 1024 * 1024):
    # Largest depth tile (dt output planes) whose double-buffered VMEM
    # footprint (with (8,128) tile padding) fits a conservative budget.
    def padded_bytes(lead, sub, lane):
        return lead * _round_up(sub, 8) * _round_up(lane, 128) * 4

    best = 1
    for dt in range(1, Do + 1):
        if Do % dt:
            continue
        in_b = padded_bytes(2 * dt * H, Wg, K)
        out_b = padded_bytes(dt * Ho, Wg, Nout)
        if 2 * (in_b + out_b) <= budget_bytes:
            best = dt
    return best


# ----------------------------- module forward --------------------------------


@functools.partial(jax.jit, static_argnames=())
def transition_forward(x, gamma, beta, running_mean, running_var, conv_weight,
                       eps=1e-5):
    """_Transition forward. x: (N, Cin, D, H, W) NCDHW (PyTorch layout).

    conv_weight: (Cout, Cin) or (Cout, Cin, 1, 1, 1) (Conv3d 1x1x1, no bias).
    Returns (N, Cout, D//2, H//2, W//2).
    """
    N, Cin, D, H, W = x.shape
    conv_w = conv_weight.reshape(conv_weight.shape[0], Cin)      # (Cout, Cin)
    Cout = conv_w.shape[0]
    assert D % 2 == 0 and H % 2 == 0 and W % 2 == 0

    f = _pick_lane_fold(W, Cin)            # even; W-pairs folded into lanes
    Wg = W // f
    K = f * Cin
    Nout = (f // 2) * Cout
    Do, Ho, Wo = D // 2, H // 2, W // 2

    # Fold inference-mode BatchNorm into per-channel scale/shift.
    scale = gamma * jax.lax.rsqrt(running_var + eps)
    shift = beta - running_mean * scale
    scale_p = jnp.tile(scale, f).reshape(1, K)
    shift_p = jnp.tile(shift, f).reshape(1, K)

    # Fuse the W-direction 2x average pooling into the conv weight:
    # block-diagonal [w_io; w_io] / 8 maps packed lanes (w-pair, Cin) -> (pair, Cout).
    w_io = jnp.transpose(conv_w)                                   # (Cin, Cout)
    w_pair = jnp.concatenate([w_io, w_io], axis=0) * 0.125         # (2Cin, Cout)
    w_big = jnp.kron(jnp.eye(f // 2, dtype=w_pair.dtype), w_pair)  # (K, Nout)

    # NCDHW -> NDHWC, pack W-pairs into lanes, merge N and D for a 1-D grid.
    x_p = jnp.transpose(x, (0, 2, 3, 4, 1)).reshape(N * D, H, Wg, K)

    dt = _pick_dt(Do, H, Ho, Wg, K, Nout)
    grid = (N * Do // dt,)   # dt | Do, so blocks never straddle batch entries

    out4 = pl.pallas_call(
        _transition_kernel,
        out_shape=jax.ShapeDtypeStruct((N * Do, Ho, Wg, Nout), jnp.float32),
        grid=grid,
        in_specs=[
            pl.BlockSpec((2 * dt, H, Wg, K), lambda g: (g, 0, 0, 0)),
            pl.BlockSpec((1, K), lambda g: (0, 0)),
            pl.BlockSpec((1, K), lambda g: (0, 0)),
            pl.BlockSpec((K, Nout), lambda g: (0, 0)),
        ],
        out_specs=pl.BlockSpec((dt, Ho, Wg, Nout), lambda g: (g, 0, 0, 0)),
        compiler_params=pltpu.CompilerParams(
            dimension_semantics=("parallel",)),   # shards across TCs on v7x
    )(x_p, scale_p, shift_p, w_big)

    # Unpack lanes: (N*Do, Ho, Wg, (f//2)*Cout) -> (N, Do, Ho, Wo, Cout) -> NCDHW
    out = out4.reshape(N, Do, Ho, Wg, f // 2, Cout).reshape(N, Do, Ho, Wo, Cout)
    return jnp.transpose(out, (0, 4, 1, 2, 3))


# ----------------------------- reference (pure JAX) ---------------------------


def transition_ref(x, gamma, beta, running_mean, running_var, conv_w, eps=1e-5):
    b = lambda v: v[None, :, None, None, None]
    xh = (x - b(running_mean)) / jnp.sqrt(b(running_var) + eps)
    xh = xh * b(gamma) + b(beta)
    xh = jnp.maximum(xh, 0.0)
    y = jnp.einsum("ncdhw,oc->nodhw", xh, conv_w.reshape(conv_w.shape[0], -1))
    N, Co, D, H, W = y.shape
    return y.reshape(N, Co, D // 2, 2, H // 2, 2, W // 2, 2).mean(axis=(3, 5, 7))


# ----------------------------- main -------------------------------------------


if __name__ == "__main__":
    def run_case(key, N, Cin, Cout, D, H, W):
        ks = jax.random.split(key, 6)
        x = jax.random.normal(ks[0], (N, Cin, D, H, W), jnp.float32)
        gamma = 1.0 + 0.1 * jax.random.normal(ks[1], (Cin,), jnp.float32)
        beta = 0.1 * jax.random.normal(ks[2], (Cin,), jnp.float32)
        mean = 0.1 * jax.random.normal(ks[3], (Cin,), jnp.float32)
        var = jnp.abs(1.0 + 0.1 * jax.random.normal(ks[4], (Cin,), jnp.float32))
        w = 0.2 * jax.random.normal(ks[5], (Cout, Cin), jnp.float32)

        out = transition_forward(x, gamma, beta, mean, var, w)
        out = jax.block_until_ready(out)

        ref = transition_ref(x, gamma, beta, mean, var, w)
        assert out.shape == ref.shape, (out.shape, ref.shape)
        max_err = float(jnp.max(jnp.abs(out - ref)))
        assert jnp.allclose(out, ref, rtol=1e-4, atol=1e-4), max_err
        return max_err

    key = jax.random.PRNGKey(0)
    k1, k2 = jax.random.split(key)

    # Case 1: small transition (exercises lane fold f=2, grid of 2 steps).
    run_case(k1, N=2, Cin=8, Cout=4, D=8, H=8, W=16)
    # Case 2: wider W (exercises lane fold f=4 packing path).
    run_case(k2, N=1, Cin=4, Cout=8, D=4, H=16, W=32)

    print("KERNEL_OK")
</pallas_src>

<mosaic_0001>
module attributes {stable_mosaic.version = 11 : i64} {
  func.func @_transition_kernel(%arg0: i32, %arg1: memref<8x8x8x16xf32, #tpu.memory_space<vmem>>, %arg2: memref<1x16xf32, #tpu.memory_space<vmem>>, %arg3: memref<1x16xf32, #tpu.memory_space<vmem>>, %arg4: memref<16x4xf32, #tpu.memory_space<vmem>>, %arg5: memref<4x4x8x4xf32, #tpu.memory_space<vmem>>) attributes {dimension_semantics = [#tpu.dimension_semantics<parallel>], iteration_bounds = array<i64: 2>, scalar_prefetch = 0 : i64, scratch_operands = 0 : i64, tpu.core_type = #tpu.core_type<tc>, window_params = [{transform_indices = @transform_0, window_bounds = array<i64: 8, 8, 8, 16>}, {pipeline_mode = #tpu.pipeline_mode<synchronous>, transform_indices = @transform_1, window_bounds = array<i64: 1, 16>}, {pipeline_mode = #tpu.pipeline_mode<synchronous>, transform_indices = @transform_2, window_bounds = array<i64: 1, 16>}, {pipeline_mode = #tpu.pipeline_mode<synchronous>, transform_indices = @transform_3, window_bounds = array<i64: 16, 4>}, {transform_indices = @transform_4, window_bounds = array<i64: 4, 4, 8, 4>}]} {
    %c0 = arith.constant 0 : index
    %c0_0 = arith.constant 0 : index
    %c0_1 = arith.constant 0 : index
    %c0_2 = arith.constant 0 : index
    %0 = vector.load %arg1[%c0, %c0_0, %c0_1, %c0_2] : memref<8x8x8x16xf32, #tpu.memory_space<vmem>>, vector<8x8x8x16xf32>
    %c0_3 = arith.constant 0 : index
    %c0_4 = arith.constant 0 : index
    %1 = vector.load %arg2[%c0_3, %c0_4] : memref<1x16xf32, #tpu.memory_space<vmem>>, vector<1x16xf32>
    %2 = vector.shape_cast %1 : vector<1x16xf32> to vector<1x1x1x16xf32>
    %3 = vector.broadcast %2 : vector<1x1x1x16xf32> to vector<8x8x8x16xf32>
    %4 = arith.mulf %0, %3 : vector<8x8x8x16xf32>
    %c0_5 = arith.constant 0 : index
    %c0_6 = arith.constant 0 : index
    %5 = vector.load %arg3[%c0_5, %c0_6] : memref<1x16xf32, #tpu.memory_space<vmem>>, vector<1x16xf32>
    %6 = vector.shape_cast %5 : vector<1x16xf32> to vector<1x1x1x16xf32>
    %7 = vector.broadcast %6 : vector<1x1x1x16xf32> to vector<8x8x8x16xf32>
    %8 = arith.addf %4, %7 : vector<8x8x8x16xf32>
    %cst = arith.constant 0.000000e+00 : f32
    %9 = vector.broadcast %cst : f32 to vector<8x8x8x16xf32>
    %10 = arith.maximumf %8, %9 : vector<8x8x8x16xf32>
    %11 = vector.shape_cast %10 : vector<8x8x8x16xf32> to vector<4x2x8x8x16xf32>
    %12 = vector.extract_strided_slice %11 {offsets = [0, 0, 0, 0, 0], sizes = [4, 1, 8, 8, 16], strides = [1, 1, 1, 1, 1]} : vector<4x2x8x8x16xf32> to vector<4x1x8x8x16xf32>
    %13 = vector.shape_cast %12 : vector<4x1x8x8x16xf32> to vector<4x8x8x16xf32>
    %14 = vector.extract_strided_slice %11 {offsets = [0, 1, 0, 0, 0], sizes = [4, 1, 8, 8, 16], strides = [1, 1, 1, 1, 1]} : vector<4x2x8x8x16xf32> to vector<4x1x8x8x16xf32>
    %15 = vector.shape_cast %14 : vector<4x1x8x8x16xf32> to vector<4x8x8x16xf32>
    %16 = arith.addf %13, %15 : vector<4x8x8x16xf32>
    %17 = vector.shape_cast %16 : vector<4x8x8x16xf32> to vector<4x4x2x8x16xf32>
    %18 = vector.extract_strided_slice %17 {offsets = [0, 0, 0, 0, 0], sizes = [4, 4, 1, 8, 16], strides = [1, 1, 1, 1, 1]} : vector<4x4x2x8x16xf32> to vector<4x4x1x8x16xf32>
    %19 = vector.shape_cast %18 : vector<4x4x1x8x16xf32> to vector<4x4x8x16xf32>
    %20 = vector.extract_strided_slice %17 {offsets = [0, 0, 1, 0, 0], sizes = [4, 4, 1, 8, 16], strides = [1, 1, 1, 1, 1]} : vector<4x4x2x8x16xf32> to vector<4x4x1x8x16xf32>
    %21 = vector.shape_cast %20 : vector<4x4x1x8x16xf32> to vector<4x4x8x16xf32>
    %22 = arith.addf %19, %21 : vector<4x4x8x16xf32>
    %23 = vector.shape_cast %22 : vector<4x4x8x16xf32> to vector<128x16xf32>
    %c0_7 = arith.constant 0 : index
    %c0_8 = arith.constant 0 : index
    %24 = vector.load %arg4[%c0_7, %c0_8] : memref<16x4xf32, #tpu.memory_space<vmem>>, vector<16x4xf32>
    %cst_9 = arith.constant dense<0.000000e+00> : vector<128x4xf32>
    %25 = tpu.matmul %23, %24, %cst_9 {dimension_numbers = #tpu.dot_dimension_numbers<[1], [0], [0], [1], [0, 0, 1, 1], [], []>} : vector<128x16xf32>, vector<16x4xf32>, vector<128x4xf32> -> vector<128x4xf32>
    %26 = vector.shape_cast %25 : vector<128x4xf32> to vector<4x4x8x4xf32>
    %c0_10 = arith.constant 0 : index
    %c0_11 = arith.constant 0 : index
    %c0_12 = arith.constant 0 : index
    %c0_13 = arith.constant 0 : index
    %27 = vector.load %arg5[%c0_10, %c0_11, %c0_12, %c0_13] : memref<4x4x8x4xf32, #tpu.memory_space<vmem>>, vector<4x4x8x4xf32>
    tpu.vector_store %arg5[%c0_10, %c0_11, %c0_12, %c0_13], %26 {strides = array<i32>} : memref<4x4x8x4xf32, #tpu.memory_space<vmem>>, vector<4x4x8x4xf32>,
    return
  }
  func.func @transform_0(%arg0: i32) -> (i32, i32, i32, i32) {
    %c0_i32 = arith.constant 0 : i32
    %c0_i32_0 = arith.constant 0 : i32
    %c0_i32_1 = arith.constant 0 : i32
    %c0_i32_2 = arith.constant 0 : i32
    return %arg0, %c0_i32, %c0_i32_0, %c0_i32_1 : i32, i32, i32, i32
  }
  func.func @transform_1(%arg0: i32) -> (i32, i32) {
    %c0_i32 = arith.constant 0 : i32
    %c0_i32_0 = arith.constant 0 : i32
    %c0_i32_1 = arith.constant 0 : i32
    return %c0_i32, %c0_i32_0 : i32, i32
  }
  func.func @transform_2(%arg0: i32) -> (i32, i32) {
    %c0_i32 = arith.constant 0 : i32
    %c0_i32_0 = arith.constant 0 : i32
    %c0_i32_1 = arith.constant 0 : i32
    return %c0_i32, %c0_i32_0 : i32, i32
  }
  func.func @transform_3(%arg0: i32) -> (i32, i32) {
    %c0_i32 = arith.constant 0 : i32
    %c0_i32_0 = arith.constant 0 : i32
    %c0_i32_1 = arith.constant 0 : i32
    return %c0_i32, %c0_i32_0 : i32, i32
  }
  func.func @transform_4(%arg0: i32) -> (i32, i32, i32, i32) {
    %c0_i32 = arith.constant 0 : i32
    %c0_i32_0 = arith.constant 0 : i32
    %c0_i32_1 = arith.constant 0 : i32
    %c0_i32_2 = arith.constant 0 : i32
    return %arg0, %c0_i32, %c0_i32_0, %c0_i32_1 : i32, i32, i32, i32
  }
}

</mosaic_0001>

<llo_original>
// kernel: tile.13
$region0: #{tile.13}
  #allocation0 [shape = 's32[1]{0}', space=sflag, size = 0x4, scoped, tag = 'scoped memory for tile.13']
  %s0 = inlined_call_operand.vmem [shape: f32[8], index: 0, kind: input, shape index: {}]
  %s1 = inlined_call_operand.vmem [shape: f32[2,8], index: 1, kind: output, shape index: {}]
  // Predicated region
  $region2: #{tile.13} parent=0 // pred_check
    _
  $region3: #{tile.13} parent=0 // pred_check_branch
    %3 = sbr.rel (0) target = $region5
  $region4: #{tile.13} parent=0 // pred_region
    _
  $region5: #{tile.13} parent=0 // pred_fallthru
    _
  %v4 = vld [vmem:[%s0] ss:$0 sm:$0xff]
  %5 = vst [vmem:[%s1] sm:$0x3] %v4

// kernel: tile.14
$region0: #{tile.14}
  %s0 = inlined_call_operand.vmem [shape: f32[2,8], index: 0, kind: input, shape index: {}]
  %s1 = inlined_call_operand.vmem [shape: f32[1,16], index: 1, kind: output, shape index: {}]
  $region1: #{tile.14} parent=0
    #allocation0 [shape = 'u8[4096]{0}', space=vmem, size = 0x1000, scoped, tag = 'scoped mem for output reshape']
    #allocation1 [shape = 'u8[4096]{0}', space=vmem, size = 0x1000, scoped, tag = 'scoped mem for input reshape']
    %s3 = sshllo.u32 0, 2
    %v4 = vld [vmem:[%s0] sm:%s3]
    %5 = vst [vmem:[#allocation1] sm:%s3] %v4
    %v6 = vld [vmem:[#allocation1] sm:$0x1]
    %vm7 = vcmask 64512
    %8 = vst.msk [vmem:[#allocation0] sm:$0x1] %vm7, %v6
    %s9 = scalar_lea.vmem [#allocation1], 1
    %v10 = vld [vmem:[%s9] sm:$0x1]
    %11 = vrot.lane.b32.xlu0 %v10, 8
    %v12 = vpop.permute.xlu0 %11
    %vm13 = vcmask 130112
    %14 = vst.msk [vmem:[#allocation0] sm:$0x1] %vm13, %v12
    %s16 = sshllo.u32 0, 1
    %v18 = vld [vmem:[#allocation0] sm:%s16]
    %s19 = sshllo.u32 0, 1
    %20 = vst [vmem:[%s1] sm:%s19] %v18

// kernel: transition_forward.1
$region0: #{transition_forward.1}
  #allocation0 [shape = 'u32[]', space=smem, size = 0x4, offset = 0x4, fixed_abs, tag = 'smem constant byte address 0x4 - core index']
  #allocation1 [shape = 'u32[144,128]{1,0:T(1,128)}', space=vmem, size = 0x12000, scoped, tag = 'internal scratch']
  %s0 = inlined_call_operand.vmem [shape: f32[16,8,8,16], index: 0, kind: input, shape index: {}]
  %s1 = inlined_call_operand.vmem [shape: f32[1,16], index: 1, kind: input, shape index: {}]
  %s2 = inlined_call_operand.vmem [shape: f32[1,16], index: 2, kind: input, shape index: {}]
  %s3 = inlined_call_operand.vmem [shape: f32[16,4], index: 3, kind: input, shape index: {}]
  %s4 = inlined_call_operand.vmem [shape: f32[8,4,8,4], index: 4, kind: output, shape index: {}]
  %s5 = sld [smem:[#allocation0]]
  $region49: #{transition_forward.1} parent=0
    _
  %s7 = ssub.s32 1, %s5
  %s8 = scalar_select 0, %s7, %s5
  loop: start=0, step=1, limit=4
  $region2: #{transition_forward.1} parent=0 // loop_pre_header
    _
  $region3: #{transition_forward.1} parent=0 // loop_header
    %s10 = sphi 0, %s14
    %p11 = scmp.ge.s32.totalorder %s10, 4
    %s20 = sphi 0, %s22
    %s23 = sphi 0, %s20
    %s24 = sphi 0, %s23
    %s40 = sphi 0, %s24
    %s44 = sphi 0, %s44
    %s46 = sphi 0, %s44
    %s47 = sphi 0, %s46
    %s61 = sphi 0, %s47
    %s65 = sphi 0, %s65
    %s67 = sphi 0, %s65
    %s68 = sphi 0, %s67
    %s82 = sphi 0, %s68
    %s86 = sphi 0, %s86
    %s88 = sphi 0, %s86
    %s89 = sphi 0, %s88
    %s103 = sphi 0, %s89
    %s109 = sphi 0, %s111
    %s112 = sphi 0, %s109
    %s113 = sphi 0, %s112
    %s129 = sphi 0, %s113
  $region4: #{transition_forward.1} parent=0 // loop_header_branch
    %13 = sbr.rel (%p11) target = $region8
  $region5: #{transition_forward.1} parent=0 // loop_body
    %s15 = ssub.s32 %s10, 1
    %s16 = ssub.s32 %s10, 2
    %s17 = sadd.s32 %s10, 1
    %s18 = ssub.s32 %s10, %s17
    %p19 = scmp.eq.s32.totalorder %s18, 0
    %s21 = sadd.s32 %s20, 1
    %s22 = scalar_select %p19, %s20, %s21
    %p25 = pneg %p19
    %p26 = scmp.eq.s32.totalorder %s10, 1
    %p27 = por %p25, %p26
    %p28 = scmp.ne.s32.totalorder %s20, %s23
    %p29 = scmp.eq.s32.totalorder %s10, 0
    %p30 = por %p28, %p29
    %p31 = scmp.ne.s32.totalorder %s20, %s23
    %p32 = scmp.eq.s32.totalorder %s15, 1
    %p33 = por %p31, %p32
    %p34 = scmp.ne.s32.totalorder %s23, %s24
    %p35 = scmp.eq.s32.totalorder %s15, 0
    %p36 = por %p34, %p35
    %p37 = scmp.ne.s32.totalorder %s23, %s24
    %p38 = scmp.eq.s32.totalorder %s16, 1
    %p39 = por %p37, %p38
    %p41 = scmp.ne.s32.totalorder %s24, %s40
    %p42 = scmp.eq.s32.totalorder %s16, 0
    %p43 = por %p41, %p42
    %s45 = sadd.s32 %s44, 1
    %p48 = scmp.eq.s32.totalorder %s10, 1
    %p49 = scmp.ne.s32.totalorder %s44, %s46
    %p50 = scmp.eq.s32.totalorder %s10, 0
    %p51 = por %p49, %p50
    %p52 = scmp.ne.s32.totalorder %s44, %s46
    %p53 = scmp.eq.s32.totalorder %s15, 1
    %p54 = por %p52, %p53
    %p55 = scmp.ne.s32.totalorder %s46, %s47
    %p56 = scmp.eq.s32.totalorder %s15, 0
    %p57 = por %p55, %p56
    %p58 = scmp.ne.s32.totalorder %s46, %s47
    %p59 = scmp.eq.s32.totalorder %s16, 1
    %p60 = por %p58, %p59
    %p62 = scmp.ne.s32.totalorder %s47, %s61
    %p63 = scmp.eq.s32.totalorder %s16, 0
    %p64 = por %p62, %p63
    %s66 = sadd.s32 %s65, 1
    %p69 = scmp.eq.s32.totalorder %s10, 1
    %p70 = scmp.ne.s32.totalorder %s65, %s67
    %p71 = scmp.eq.s32.totalorder %s10, 0
    %p72 = por %p70, %p71
    %p73 = scmp.ne.s32.totalorder %s65, %s67
    %p74 = scmp.eq.s32.totalorder %s15, 1
    %p75 = por %p73, %p74
    %p76 = scmp.ne.s32.totalorder %s67, %s68
    %p77 = scmp.eq.s32.totalorder %s15, 0
    %p78 = por %p76, %p77
    %p79 = scmp.ne.s32.totalorder %s67, %s68
    %p80 = scmp.eq.s32.totalorder %s16, 1
    %p81 = por %p79, %p80
    %p83 = scmp.ne.s32.totalorder %s68, %s82
    %p84 = scmp.eq.s32.totalorder %s16, 0
    %p85 = por %p83, %p84
    %s87 = sadd.s32 %s86, 1
    %p90 = scmp.eq.s32.totalorder %s10, 1
    %p91 = scmp.ne.s32.totalorder %s86, %s88
    %p92 = scmp.eq.s32.totalorder %s10, 0
    %p93 = por %p91, %p92
    %p94 = scmp.ne.s32.totalorder %s86, %s88
    %p95 = scmp.eq.s32.totalorder %s15, 1
    %p96 = por %p94, %p95
    %p97 = scmp.ne.s32.totalorder %s88, %s89
    %p98 = scmp.eq.s32.totalorder %s15, 0
    %p99 = por %p97, %p98
    %p100 = scmp.ne.s32.totalorder %s88, %s89
    %p101 = scmp.eq.s32.totalorder %s16, 1
    %p102 = por %p100, %p101
    %p104 = scmp.ne.s32.totalorder %s89, %s103
    %p105 = scmp.eq.s32.totalorder %s16, 0
    %p106 = por %p104, %p105
    %s107 = ssub.s32 %s10, %s17
    %p108 = scmp.eq.s32.totalorder %s107, 0
    %s110 = sadd.s32 %s109, 1
    %s111 = scalar_select %p108, %s109, %s110
    %p114 = pneg %p108
    %p115 = scmp.eq.s32.totalorder %s10, 1
    %p116 = por %p114, %p115
    %p117 = scmp.ne.s32.totalorder %s109, %s112
    %p118 = scmp.eq.s32.totalorder %s10, 0
    %p119 = por %p117, %p118
    %p120 = scmp.ne.s32.totalorder %s109, %s112
    %p121 = scmp.eq.s32.totalorder %s15, 1
    %p122 = por %p120, %p121
    %p123 = scmp.ne.s32.totalorder %s112, %s113
    %p124 = scmp.eq.s32.totalorder %s15, 0
    %p125 = por %p123, %p124
    %p126 = scmp.ne.s32.totalorder %s112, %s113
    %p127 = scmp.eq.s32.totalorder %s16, 1
    %p128 = por %p126, %p127
    %p130 = scmp.ne.s32.totalorder %s113, %s129
    %p131 = scmp.eq.s32.totalorder %s16, 0
    %p132 = por %p130, %p131
    %p133 = scmp.le.s32.totalorder 1, %s10
    %p134 = scmp.lt.s32.totalorder %s10, 3
    %p135 = pnand %p133, %p134
    %p136 = pneg %p135
    // Predicated region
    $region9: #{transition_forward.1} parent=5 // pred_check
      _
    $region10: #{transition_forward.1} parent=5 // pred_check_branch
      %138 = sbr.rel (%p135) target = $region12
    $region11: #{transition_forward.1} parent=5 // pred_region
      %s139 = ssub.s32 %s10, 1
      // Predicated region
      $region13: #{transition_forward.1} parent=11 // pred_check
        %p140 = pneg %p57
      $region14: #{transition_forward.1} parent=11 // pred_check_branch
        %142 = sbr.rel (%p140) target = $region16
      $region15: #{transition_forward.1} parent=11 // pred_region
        _
      $region16: #{transition_forward.1} parent=11 // pred_fallthru
        _
      // Predicated region
      $region17: #{transition_forward.1} parent=11 // pred_check
        %p143 = pneg %p78
      $region18: #{transition_forward.1} parent=11 // pred_check_branch
        %145 = sbr.rel (%p143) target = $region20
      $region19: #{transition_forward.1} parent=11 // pred_region
        _
      $region20: #{transition_forward.1} parent=11 // pred_fallthru
        _
      // Predicated region
      $region21: #{transition_forward.1} parent=11 // pred_check
        %p146 = pneg %p99
      $region22: #{transition_forward.1} parent=11 // pred_check_branch
        %148 = sbr.rel (%p146) target = $region24
      $region23: #{transition_forward.1} parent=11 // pred_region
        _
      $region24: #{transition_forward.1} parent=11 // pred_fallthru
        _
    $region12: #{transition_forward.1} parent=5 // pred_fallthru
      _
    %p149 = scmp.lt.s32.totalorder %s10, 2
    // Predicated region
    $region25: #{transition_forward.1} parent=5 // pred_check
      %p150 = pneg %p149
    $region26: #{transition_forward.1} parent=5 // pred_check_branch
      %152 = sbr.rel (%p150) target = $region28
    $region27: #{transition_forward.1} parent=5 // pred_region
      // Predicated region
      $region29: #{transition_forward.1} parent=27 // pred_check
        %p153 = pneg %p30
      $region30: #{transition_forward.1} parent=27 // pred_check_branch
        %155 = sbr.rel (%p153) target = $region32
      $region31: #{transition_forward.1} parent=27 // pred_region
        %s156 = smul.u32 8, %s10
        %p157 = scmp.lt.s32.totalorder %s156, 15
        %s158 = scalar_select %p157, %s156, 15
        %s159 = smul.addr %s158, 8
        %s160 = smul.addr %s159, 8
        %s161 = scalar_lea.vmem %s0, %s160
        %s162 = smul.u32 8, %s10
      $region32: #{transition_forward.1} parent=27 // pred_fallthru
        _
    $region28: #{transition_forward.1} parent=5 // pred_fallthru
      _
    %p163 = scmp.le.s32.totalorder 1, %s10
    %p164 = scmp.lt.s32.totalorder %s10, 3
    %p165 = pnand %p163, %p164
    %p166 = pneg %p165
    // Predicated region
    $region33: #{transition_forward.1} parent=5 // pred_check
      _
    $region34: #{transition_forward.1} parent=5 // pred_check_branch
      %168 = sbr.rel (%p165) target = $region36
    $region35: #{transition_forward.1} parent=5 // pred_region
      %s169 = ssub.s32 %s10, 1
      %s170 = smul.u32 8, %s15
      %p171 = scmp.lt.s32.totalorder %s170, 15
      %s172 = scalar_select %p171, %s170, 15
      %s173 = smul.addr %s172, 8
      %s174 = smul.addr %s173, 8
      %s175 = scalar_lea.vmem %s0, %s174
      %p176 = pneg %p36
      %p177 = pneg %p33
      %p178 = pneg %p57
      %p179 = pneg %p54
      %p180 = pneg %p78
      %p181 = pneg %p75
      %p182 = pneg %p99
      %p183 = pneg %p96
      %p184 = pneg %p125
      %p185 = pneg %p122
      %s186 = smul.u32 4, %s15
      %p187 = scmp.lt.s32.totalorder %s186, 7
      %s188 = scalar_select %p187, %s186, 7
      %s189 = smul.addr %s188, 4
      %s190 = smul.addr %s189, 8
      %s191 = scalar_lea.vmem %s4, %s190
      %s192 = smul.u32 8, %s15
      %p193 = scmp.lt.s32.totalorder %s192, 15
      %s194 = scalar_select %p193, %s192, 15
      %s195 = smul.addr %s194, 8
      %s196 = smul.addr %s195, 8
      %s197 = scalar_lea.vmem %s0, %s196
      %s198 = smul.u32 8, %s15
      %s199 = smul.u32 4, %s15
      %p200 = scmp.lt.s32.totalorder %s199, 7
      %s201 = scalar_select %p200, %s199, 7
      %s202 = smul.addr %s201, 4
      %s203 = smul.addr %s202, 8
      %s204 = scalar_lea.vmem %s4, %s203
      %s205 = smul.u32 4, %s15
      %v206 = vld [vmem:[%s197] sm:$0xff]
      %v207 = vld [vmem:[%s197 + $0x8] sm:$0xff]
      %v208 = vld [vmem:[%s197 + $0x10] sm:$0xff]
      %v209 = vld [vmem:[%s197 + $0x18] sm:$0xff]
      %v210 = vld [vmem:[%s197 + $0x20] sm:$0xff]
      %v211 = vld [vmem:[%s197 + $0x28] sm:$0xff]
      %v212 = vld [vmem:[%s197 + $0x30] sm:$0xff]
      %v213 = vld [vmem:[%s197 + $0x38] sm:$0xff]
      %v214 = vld [vmem:[%s197 + $0x40] sm:$0xff]
      %v215 = vld [vmem:[%s197 + $0x48] sm:$0xff]
      %v216 = vld [vmem:[%s197 + $0x50] sm:$0xff]
      %v217 = vld [vmem:[%s197 + $0x58] sm:$0xff]
      %v218 = vld [vmem:[%s197 + $0x60] sm:$0xff]
      %v219 = vld [vmem:[%s197 + $0x68] sm:$0xff]
      %v220 = vld [vmem:[%s197 + $0x70] sm:$0xff]
      %v221 = vld [vmem:[%s197 + $0x78] sm:$0xff]
      %v222 = vld [vmem:[%s197 + $0x80] sm:$0xff]
      %v223 = vld [vmem:[%s197 + $0x88] sm:$0xff]
      %v224 = vld [vmem:[%s197 + $0x90] sm:$0xff]
      %v225 = vld [vmem:[%s197 + $0x98] sm:$0xff]
      %v226 = vld [vmem:[%s197 + $0xa0] sm:$0xff]
      %v227 = vld [vmem:[%s197 + $0xa8] sm:$0xff]
      %v228 = vld [vmem:[%s197 + $0xb0] sm:$0xff]
      %v229 = vld [vmem:[%s197 + $0xb8] sm:$0xff]
      %v230 = vld [vmem:[%s197 + $0xc0] sm:$0xff]
      %v231 = vld [vmem:[%s197 + $0xc8] sm:$0xff]
      %v232 = vld [vmem:[%s197 + $0xd0] sm:$0xff]
      %v233 = vld [vmem:[%s197 + $0xd8] sm:$0xff]
      %v234 = vld [vmem:[%s197 + $0xe0] sm:$0xff]
      %v235 = vld [vmem:[%s197 + $0xe8] sm:$0xff]
      %v236 = vld [vmem:[%s197 + $0xf0] sm:$0xff]
      %v237 = vld [vmem:[%s197 + $0xf8] sm:$0xff]
      %v238 = vld [vmem:[%s197 + $0x100] sm:$0xff]
      %v239 = vld [vmem:[%s197 + $0x108] sm:$0xff]
      %v240 = vld [vmem:[%s197 + $0x110] sm:$0xff]
      %v241 = vld [vmem:[%s197 + $0x118] sm:$0xff]
      %v242 = vld [vmem:[%s197 + $0x120] sm:$0xff]
      %v243 = vld [vmem:[%s197 + $0x128] sm:$0xff]
      %v244 = vld [vmem:[%s197 + $0x130] sm:$0xff]
      %v245 = vld [vmem:[%s197 + $0x138] sm:$0xff]
      %v246 = vld [vmem:[%s197 + $0x140] sm:$0xff]
      %v247 = vld [vmem:[%s197 + $0x148] sm:$0xff]
      %v248 = vld [vmem:[%s197 + $0x150] sm:$0xff]
      %v249 = vld [vmem:[%s197 + $0x158] sm:$0xff]
      %v250 = vld [vmem:[%s197 + $0x160] sm:$0xff]
      %v251 = vld [vmem:[%s197 + $0x168] sm:$0xff]
      %v252 = vld [vmem:[%s197 + $0x170] sm:$0xff]
      %v253 = vld [vmem:[%s197 + $0x178] sm:$0xff]
      %v254 = vld [vmem:[%s197 + $0x180] sm:$0xff]
      %v255 = vld [vmem:[%s197 + $0x188] sm:$0xff]
      %v256 = vld [vmem:[%s197 + $0x190] sm:$0xff]
      %v257 = vld [vmem:[%s197 + $0x198] sm:$0xff]
      %v258 = vld [vmem:[%s197 + $0x1a0] sm:$0xff]
      %v259 = vld [vmem:[%s197 + $0x1a8] sm:$0xff]
      %v260 = vld [vmem:[%s197 + $0x1b0] sm:$0xff]
      %v261 = vld [vmem:[%s197 + $0x1b8] sm:$0xff]
      %v262 = vld [vmem:[%s197 + $0x1c0] sm:$0xff]
      %v263 = vld [vmem:[%s197 + $0x1c8] sm:$0xff]
      %v264 = vld [vmem:[%s197 + $0x1d0] sm:$0xff]
      %v265 = vld [vmem:[%s197 + $0x1d8] sm:$0xff]
      %v266 = vld [vmem:[%s197 + $0x1e0] sm:$0xff]
      %v267 = vld [vmem:[%s197 + $0x1e8] sm:$0xff]
      %v268 = vld [vmem:[%s197 + $0x1f0] sm:$0xff]
      %v269 = vld [vmem:[%s197 + $0x1f8] sm:$0xff]
      %v270 = vld [vmem:[%s1] sm:$0x1]
      %v272 = vlaneseq
      %v273 = vshrl.u32 %v272, 7
      %v274 = vsub.s32 0, %v273
      %v275 = vrot.slane %v270, %v274
      %v277 = vmul.f32 %v206, %v275
      %v278 = vmul.f32 %v207, %v275
      %v279 = vmul.f32 %v208, %v275
      %v280 = vmul.f32 %v209, %v275
      %v281 = vmul.f32 %v210, %v275
      %v282 = vmul.f32 %v211, %v275
      %v283 = vmul.f32 %v212, %v275
      %v284 = vmul.f32 %v213, %v275
      %v285 = vmul.f32 %v214, %v275
      %v286 = vmul.f32 %v215, %v275
      %v287 = vmul.f32 %v216, %v275
      %v288 = vmul.f32 %v217, %v275
      %v289 = vmul.f32 %v218, %v275
      %v290 = vmul.f32 %v219, %v275
      %v291 = vmul.f32 %v220, %v275
      %v292 = vmul.f32 %v221, %v275
      %v293 = vmul.f32 %v222, %v275
      %v294 = vmul.f32 %v223, %v275
      %v295 = vmul.f32 %v224, %v275
      %v296 = vmul.f32 %v225, %v275
      %v297 = vmul.f32 %v226, %v275
      %v298 = vmul.f32 %v227, %v275
      %v299 = vmul.f32 %v228, %v275
      %v300 = vmul.f32 %v229, %v275
      %v301 = vmul.f32 %v230, %v275
      %v302 = vmul.f32 %v231, %v275
      %v303 = vmul.f32 %v232, %v275
      %v304 = vmul.f32 %v233, %v275
      %v305 = vmul.f32 %v234, %v275
      %v306 = vmul.f32 %v235, %v275
      %v307 = vmul.f32 %v236, %v275
      %v308 = vmul.f32 %v237, %v275
      %v309 = vmul.f32 %v238, %v275
      %v310 = vmul.f32 %v239, %v275
      %v311 = vmul.f32 %v240, %v275
      %v312 = vmul.f32 %v241, %v275
      %v313 = vmul.f32 %v242, %v275
      %v314 = vmul.f32 %v243, %v275
      %v315 = vmul.f32 %v244, %v275
      %v316 = vmul.f32 %v245, %v275
      %v317 = vmul.f32 %v246, %v275
      %v318 = vmul.f32 %v247, %v275
      %v319 = vmul.f32 %v248, %v275
      %v320 = vmul.f32 %v249, %v275
      %v321 = vmul.f32 %v250, %v275
      %v322 = vmul.f32 %v251, %v275
      %v323 = vmul.f32 %v252, %v275
      %v324 = vmul.f32 %v253, %v275
      %v325 = vmul.f32 %v254, %v275
      %v326 = vmul.f32 %v255, %v275
      %v327 = vmul.f32 %v256, %v275
      %v328 = vmul.f32 %v257, %v275
      %v329 = vmul.f32 %v258, %v275
      %v330 = vmul.f32 %v259, %v275
      %v331 = vmul.f32 %v260, %v275
      %v332 = vmul.f32 %v261, %v275
      %v333 = vmul.f32 %v262, %v275
      %v334 = vmul.f32 %v263, %v275
      %v335 = vmul.f32 %v264, %v275
      %v336 = vmul.f32 %v265, %v275
      %v337 = vmul.f32 %v266, %v275
      %v338 = vmul.f32 %v267, %v275
      %v339 = vmul.f32 %v268, %v275
      %v340 = vmul.f32 %v269, %v275
      %v341 = vld [vmem:[%s2] sm:$0x1]
      %v343 = vlaneseq
      %v344 = vshrl.u32 %v343, 7
      %v345 = vsub.s32 0, %v344
      %v346 = vrot.slane %v341, %v345
      %v348 = vadd.f32 %v277, %v346
      %v349 = vadd.f32 %v278, %v346
      %v350 = vadd.f32 %v279, %v346
      %v351 = vadd.f32 %v280, %v346
      %v352 = vadd.f32 %v281, %v346
      %v353 = vadd.f32 %v282, %v346
      %v354 = vadd.f32 %v283, %v346
      %v355 = vadd.f32 %v284, %v346
      %v356 = vadd.f32 %v285, %v346
      %v357 = vadd.f32 %v286, %v346
      %v358 = vadd.f32 %v287, %v346
      %v359 = vadd.f32 %v288, %v346
      %v360 = vadd.f32 %v289, %v346
      %v361 = vadd.f32 %v290, %v346
      %v362 = vadd.f32 %v291, %v346
      %v363 = vadd.f32 %v292, %v346
      %v364 = vadd.f32 %v293, %v346
      %v365 = vadd.f32 %v294, %v346
      %v366 = vadd.f32 %v295, %v346
      %v367 = vadd.f32 %v296, %v346
      %v368 = vadd.f32 %v297, %v346
      %v369 = vadd.f32 %v298, %v346
      %v370 = vadd.f32 %v299, %v346
      %v371 = vadd.f32 %v300, %v346
      %v372 = vadd.f32 %v301, %v346
      %v373 = vadd.f32 %v302, %v346
      %v374 = vadd.f32 %v303, %v346
      %v375 = vadd.f32 %v304, %v346
      %v376 = vadd.f32 %v305, %v346
      %v377 = vadd.f32 %v306, %v346
      %v378 = vadd.f32 %v307, %v346
      %v379 = vadd.f32 %v308, %v346
      %v380 = vadd.f32 %v309, %v346
      %v381 = vadd.f32 %v310, %v346
      %v382 = vadd.f32 %v311, %v346
      %v383 = vadd.f32 %v312, %v346
      %v384 = vadd.f32 %v313, %v346
      %v385 = vadd.f32 %v314, %v346
      %v386 = vadd.f32 %v315, %v346
      %v387 = vadd.f32 %v316, %v346
      %v388 = vadd.f32 %v317, %v346
      %v389 = vadd.f32 %v318, %v346
      %v390 = vadd.f32 %v319, %v346
      %v391 = vadd.f32 %v320, %v346
      %v392 = vadd.f32 %v321, %v346
      %v393 = vadd.f32 %v322, %v346
      %v394 = vadd.f32 %v323, %v346
      %v395 = vadd.f32 %v324, %v346
      %v396 = vadd.f32 %v325, %v346
      %v397 = vadd.f32 %v326, %v346
      %v398 = vadd.f32 %v327, %v346
      %v399 = vadd.f32 %v328, %v346
      %v400 = vadd.f32 %v329, %v346
      %v401 = vadd.f32 %v330, %v346
      %v402 = vadd.f32 %v331, %v346
      %v403 = vadd.f32 %v332, %v346
      %v404 = vadd.f32 %v333, %v346
      %v405 = vadd.f32 %v334, %v346
      %v406 = vadd.f32 %v335, %v346
      %v407 = vadd.f32 %v336, %v346
      %v408 = vadd.f32 %v337, %v346
      %v409 = vadd.f32 %v338, %v346
      %v410 = vadd.f32 %v339, %v346
      %v411 = vadd.f32 %v340, %v346
      %v412 = vmax.f32 %v348, 0.0
      %v413 = vmax.f32 %v349, 0.0
      %v414 = vmax.f32 %v350, 0.0
      %v415 = vmax.f32 %v351, 0.0
      %v416 = vmax.f32 %v352, 0.0
      %v417 = vmax.f32 %v353, 0.0
      %v418 = vmax.f32 %v354, 0.0
      %v419 = vmax.f32 %v355, 0.0
      %v420 = vmax.f32 %v356, 0.0
      %v421 = vmax.f32 %v357, 0.0
      %v422 = vmax.f32 %v358, 0.0
      %v423 = vmax.f32 %v359, 0.0
      %v424 = vmax.f32 %v360, 0.0
      %v425 = vmax.f32 %v361, 0.0
      %v426 = vmax.f32 %v362, 0.0
      %v427 = vmax.f32 %v363, 0.0
      %v428 = vmax.f32 %v364, 0.0
      %v429 = vmax.f32 %v365, 0.0
      %v430 = vmax.f32 %v366, 0.0
      %v431 = vmax.f32 %v367, 0.0
      %v432 = vmax.f32 %v368, 0.0
      %v433 = vmax.f32 %v369, 0.0
      %v434 = vmax.f32 %v370, 0.0
      %v435 = vmax.f32 %v371, 0.0
      %v436 = vmax.f32 %v372, 0.0
      %v437 = vmax.f32 %v373, 0.0
      %v438 = vmax.f32 %v374, 0.0
      %v439 = vmax.f32 %v375, 0.0
      %v440 = vmax.f32 %v376, 0.0
      %v441 = vmax.f32 %v377, 0.0
      %v442 = vmax.f32 %v378, 0.0
      %v443 = vmax.f32 %v379, 0.0
      %v444 = vmax.f32 %v380, 0.0
      %v445 = vmax.f32 %v381, 0.0
      %v446 = vmax.f32 %v382, 0.0
      %v447 = vmax.f32 %v383, 0.0
      %v448 = vmax.f32 %v384, 0.0
      %v449 = vmax.f32 %v385, 0.0
      %v450 = vmax.f32 %v386, 0.0
      %v451 = vmax.f32 %v387, 0.0
      %v452 = vmax.f32 %v388, 0.0
      %v453 = vmax.f32 %v389, 0.0
      %v454 = vmax.f32 %v390, 0.0
      %v455 = vmax.f32 %v391, 0.0
      %v456 = vmax.f32 %v392, 0.0
      %v457 = vmax.f32 %v393, 0.0
      %v458 = vmax.f32 %v394, 0.0
      %v459 = vmax.f32 %v395, 0.0
      %v460 = vmax.f32 %v396, 0.0
      %v461 = vmax.f32 %v397, 0.0
      %v462 = vmax.f32 %v398, 0.0
      %v463 = vmax.f32 %v399, 0.0
      %v464 = vmax.f32 %v400, 0.0
      %v465 = vmax.f32 %v401, 0.0
      %v466 = vmax.f32 %v402, 0.0
      %v467 = vmax.f32 %v403, 0.0
      %v468 = vmax.f32 %v404, 0.0
      %v469 = vmax.f32 %v405, 0.0
      %v470 = vmax.f32 %v406, 0.0
      %v471 = vmax.f32 %v407, 0.0
      %v472 = vmax.f32 %v408, 0.0
      %v473 = vmax.f32 %v409, 0.0
      %v474 = vmax.f32 %v410, 0.0
      %v475 = vmax.f32 %v411, 0.0
      %v476 = vadd.f32 %v412, %v420
      %v477 = vadd.f32 %v413, %v421
      %v478 = vadd.f32 %v414, %v422
      %v479 = vadd.f32 %v415, %v423
      %v480 = vadd.f32 %v416, %v424
      %v481 = vadd.f32 %v417, %v425
      %v482 = vadd.f32 %v418, %v426
      %v483 = vadd.f32 %v419, %v427
      %v484 = vadd.f32 %v428, %v436
      %v485 = vadd.f32 %v429, %v437
      %v486 = vadd.f32 %v430, %v438
      %v487 = vadd.f32 %v431, %v439
      %v488 = vadd.f32 %v432, %v440
      %v489 = vadd.f32 %v433, %v441
      %v490 = vadd.f32 %v434, %v442
      %v491 = vadd.f32 %v435, %v443
      %v492 = vadd.f32 %v444, %v452
      %v493 = vadd.f32 %v445, %v453
      %v494 = vadd.f32 %v446, %v454
      %v495 = vadd.f32 %v447, %v455
      %v496 = vadd.f32 %v448, %v456
      %v497 = vadd.f32 %v449, %v457
      %v498 = vadd.f32 %v450, %v458
      %v499 = vadd.f32 %v451, %v459
      %v500 = vadd.f32 %v460, %v468
      %v501 = vadd.f32 %v461, %v469
      %v502 = vadd.f32 %v462, %v470
      %v503 = vadd.f32 %v463, %v471
      %v504 = vadd.f32 %v464, %v472
      %v505 = vadd.f32 %v465, %v473
      %v506 = vadd.f32 %v466, %v474
      %v507 = vadd.f32 %v467, %v475
      %v508 = vadd.f32 %v476, %v477
      %v509 = vadd.f32 %v478, %v479
      %v510 = vadd.f32 %v480, %v481
      %v511 = vadd.f32 %v482, %v483
      %v512 = vadd.f32 %v484, %v485
      %v513 = vadd.f32 %v486, %v487
      %v514 = vadd.f32 %v488, %v489
      %v515 = vadd.f32 %v490, %v491
      %v516 = vadd.f32 %v492, %v493
      %v517 = vadd.f32 %v494, %v495
      %v518 = vadd.f32 %v496, %v497
      %v519 = vadd.f32 %v498, %v499
      %v520 = vadd.f32 %v500, %v501
      %v521 = vadd.f32 %v502, %v503
      %v522 = vadd.f32 %v504, %v505
      %v523 = vadd.f32 %v506, %v507
      %v524 = vld [vmem:[%s3] sm:$0xff]
      %v525 = vld [vmem:[%s3 + $0x8] sm:$0xff]
      %vm526 = vcmask 130048
      %v528 = vsel %vm526, %v508, 0
      %v531 = vsel %vm526, %v509, 0
      %v534 = vsel %vm526, %v510, 0
      %v537 = vsel %vm526, %v511, 0
      %v540 = vsel %vm526, %v512, 0
      %v543 = vsel %vm526, %v513, 0
      %v546 = vsel %vm526, %v514, 0
      %v549 = vsel %vm526, %v515, 0
      %v552 = vsel %vm526, %v516, 0
      %v555 = vsel %vm526, %v517, 0
      %v558 = vsel %vm526, %v518, 0
      %v561 = vsel %vm526, %v519, 0
      %v564 = vsel %vm526, %v520, 0
      %v567 = vsel %vm526, %v521, 0
      %v570 = vsel %vm526, %v522, 0
      %v573 = vsel %vm526, %v523, 0
      %575 = vmatprep.subr.mxu0 0.0
      %576 = vmatpush1.msra.mxu0 %v524
      %577 = vmatprep.subr.mxu0 0.0
      %578 = vmatpush1.msra.mxu0 %v525
      %579 = vmatprep.subr.mxu0 0.0
      %580 = vmatpush1.msra.mxu0 0.0
      %581 = vmatprep.subr.mxu0 0.0
      %582 = vmatpush1.msra.mxu0 0.0
      %583 = vmatprep.subr.mxu0 0.0
      %584 = vmatpush1.msra.mxu0 0.0
      %585 = vmatprep.subr.mxu0 0.0
      %586 = vmatpush1.msra.mxu0 0.0
      %587 = vmatprep.subr.mxu0 0.0
      %588 = vmatpush1.msra.mxu0 0.0
      %589 = vmatprep.subr.mxu0 0.0
      %590 = vmatpush1.msra.mxu0 0.0
      %591 = vmatprep.subr.mxu0 0.0
      %592 = vmatpush1.msra.mxu0 0.0
      %593 = vmatprep.subr.mxu0 0.0
      %594 = vmatpush1.msra.mxu0 0.0
      %595 = vmatprep.subr.mxu0 0.0
      %596 = vmatpush1.msra.mxu0 0.0
      %597 = vmatprep.subr.mxu0 0.0
      %598 = vmatpush1.msra.mxu0 0.0
      %599 = vmatprep.subr.mxu0 0.0
      %600 = vmatpush1.msra.mxu0 0.0
      %601 = vmatprep.subr.mxu0 0.0
      %602 = vmatpush1.msra.mxu0 0.0
      %603 = vmatprep.subr.mxu0 0.0
      %604 = vmatpush1.msra.mxu0 0.0
      %605 = vmatprep.subr.mxu0 0.0
      %606 = vmatpush1.msra.mxu0 0.0
      %607 = vmatprep.subr.mxu0 0.0
      %608 = vmatpush1.msra.mxu0 0.0
      %609 = vmatprep.subr.mxu0 0.0
      %610 = vmatpush1.msra.mxu0 0.0
      %611 = vmatprep.subr.mxu0 0.0
      %612 = vmatpush1.msra.mxu0 0.0
      %613 = vmatprep.subr.mxu0 0.0
      %614 = vmatpush1.msra.mxu0 0.0
      %615 = vmatprep.subr.mxu0 0.0
      %616 = vmatpush1.msra.mxu0 0.0
      %617 = vmatprep.subr.mxu0 0.0
      %618 = vmatpush1.msra.mxu0 0.0
      %619 = vmatprep.subr.mxu0 0.0
      %620 = vmatpush1.msra.mxu0 0.0
      %621 = vmatprep.subr.mxu0 0.0
      %622 = vmatpush1.msra.mxu0 0.0
      %623 = vmatprep.subr.mxu0 0.0
      %624 = vmatpush1.msra.mxu0 0.0
      %625 = vmatprep.subr.mxu0 0.0
      %626 = vmatpush1.msra.mxu0 0.0
      %627 = vmatprep.subr.mxu0 0.0
      %628 = vmatpush1.msra.mxu0 0.0
      %629 = vmatprep.subr.mxu0 0.0
      %630 = vmatpush1.msra.mxu0 0.0
      %631 = vmatprep.subr.mxu0 0.0
      %632 = vmatpush1.msra.mxu0 0.0
      %633 = vmatprep.subr.mxu0 0.0
      %634 = vmatpush1.msra.mxu0 0.0
      %635 = vmatprep.subr.mxu0 0.0
      %636 = vmatpush1.msra.mxu0 0.0
      %637 = vmatprep.subr.mxu0 0.0
      %638 = vmatpush1.msra.mxu0 0.0
      %639 = vmatprep.mubr.f32.mxu0 0.0
      %640 = vmatmul.mubr.f32.gmra.mrb[0].mxu0 %v528
      %v641 = vpop.f32.mrb[0].mxu0
      %v642 = vadd.f32 0.0, %v641
      %v643 = vpop.f32.mrb[0].mxu0
      %644 = vmatprep.mubr.f32.mxu0 0.0
      %645 = vmatmul.mubr.f32.gmra.mrb[0].mxu0 %v531
      %v646 = vpop.f32.mrb[0].mxu0
      %v647 = vadd.f32 0.0, %v646
      %v648 = vpop.f32.mrb[0].mxu0
      %649 = vmatprep.mubr.f32.mxu0 0.0
      %650 = vmatmul.mubr.f32.gmra.mrb[0].mxu0 %v534
      %v651 = vpop.f32.mrb[0].mxu0
      %v652 = vadd.f32 0.0, %v651
      %v653 = vpop.f32.mrb[0].mxu0
      %654 = vmatprep.mubr.f32.mxu0 0.0
      %655 = vmatmul.mubr.f32.gmra.mrb[0].mxu0 %v537
      %v656 = vpop.f32.mrb[0].mxu0
      %v657 = vadd.f32 0.0, %v656
      %v658 = vpop.f32.mrb[0].mxu0
      %659 = vmatprep.mubr.f32.mxu0 0.0
      %660 = vmatmul.mubr.f32.gmra.mrb[0].mxu0 %v540
      %v661 = vpop.f32.mrb[0].mxu0
      %v662 = vadd.f32 0.0, %v661
      %v663 = vpop.f32.mrb[0].mxu0
      %664 = vmatprep.mubr.f32.mxu0 0.0
      %665 = vmatmul.mubr.f32.gmra.mrb[0].mxu0 %v543
      %v666 = vpop.f32.mrb[0].mxu0
      %v667 = vadd.f32 0.0, %v666
      %v668 = vpop.f32.mrb[0].mxu0
      %669 = vmatprep.mubr.f32.mxu0 0.0
      %670 = vmatmul.mubr.f32.gmra.mrb[0].mxu0 %v546
      %v671 = vpop.f32.mrb[0].mxu0
      %v672 = vadd.f32 0.0, %v671
      %v673 = vpop.f32.mrb[0].mxu0
      %674 = vmatprep.mubr.f32.mxu0 0.0
      %675 = vmatmul.mubr.f32.gmra.mrb[0].mxu0 %v549
      %v676 = vpop.f32.mrb[0].mxu0
      %v677 = vadd.f32 0.0, %v676
      %v678 = vpop.f32.mrb[0].mxu0
      %679 = vmatprep.mubr.f32.mxu0 0.0
      %680 = vmatmul.mubr.f32.gmra.mrb[0].mxu0 %v552
      %v681 = vpop.f32.mrb[0].mxu0
      %v682 = vadd.f32 0.0, %v681
      %v683 = vpop.f32.mrb[0].mxu0
      %684 = vmatprep.mubr.f32.mxu0 0.0
      %685 = vmatmul.mubr.f32.gmra.mrb[0].mxu0 %v555
      %v686 = vpop.f32.mrb[0].mxu0
      %v687 = vadd.f32 0.0, %v686
      %v688 = vpop.f32.mrb[0].mxu0
      %689 = vmatprep.mubr.f32.mxu0 0.0
      %690 = vmatmul.mubr.f32.gmra.mrb[0].mxu0 %v558
      %v691 = vpop.f32.mrb[0].mxu0
      %v692 = vadd.f32 0.0, %v691
      %v693 = vpop.f32.mrb[0].mxu0
      %694 = vmatprep.mubr.f32.mxu0 0.0
      %695 = vmatmul.mubr.f32.gmra.mrb[0].mxu0 %v561
      %v696 = vpop.f32.mrb[0].mxu0
      %v697 = vadd.f32 0.0, %v696
      %v698 = vpop.f32.mrb[0].mxu0
      %699 = vmatprep.mubr.f32.mxu0 0.0
      %700 = vmatmul.mubr.f32.gmra.mrb[0].mxu0 %v564
      %v701 = vpop.f32.mrb[0].mxu0
      %v702 = vadd.f32 0.0, %v701
      %v703 = vpop.f32.mrb[0].mxu0
      %704 = vmatprep.mubr.f32.mxu0 0.0
      %705 = vmatmul.mubr.f32.gmra.mrb[0].mxu0 %v567
      %v706 = vpop.f32.mrb[0].mxu0
      %v707 = vadd.f32 0.0, %v706
      %v708 = vpop.f32.mrb[0].mxu0
      %709 = vmatprep.mubr.f32.mxu0 0.0
      %710 = vmatmul.mubr.f32.gmra.mrb[0].mxu0 %v570
      %v711 = vpop.f32.mrb[0].mxu0
      %v712 = vadd.f32 0.0, %v711
      %v713 = vpop.f32.mrb[0].mxu0
      %714 = vmatprep.mubr.f32.mxu0 0.0
      %715 = vmatmul.mubr.f32.gmra.mrb[0].mxu0 %v573
      %v716 = vpop.f32.mrb[0].mxu0
      %v717 = vadd.f32 0.0, %v716
      %v718 = vpop.f32.mrb[0].mxu0
      %719 = vdwg.mxu0
      %vm720 = vcmask 31744
      %721 = vst.msk [vmem:[%s204] sm:$0xff] %vm720, %v642
      %722 = vst.msk [vmem:[%s204 + $0x8] sm:$0xff] %vm720, %v647
      %723 = vst.msk [vmem:[%s204 + $0x10] sm:$0xff] %vm720, %v652
      %724 = vst.msk [vmem:[%s204 + $0x18] sm:$0xff] %vm720, %v657
      %725 = vst.msk [vmem:[%s204 + $0x20] sm:$0xff] %vm720, %v662
      %726 = vst.msk [vmem:[%s204 + $0x28] sm:$0xff] %vm720, %v667
      %727 = vst.msk [vmem:[%s204 + $0x30] sm:$0xff] %vm720, %v672
      %728 = vst.msk [vmem:[%s204 + $0x38] sm:$0xff] %vm720, %v677
      %729 = vst.msk [vmem:[%s204 + $0x40] sm:$0xff] %vm720, %v682
      %730 = vst.msk [vmem:[%s204 + $0x48] sm:$0xff] %vm720, %v687
      %731 = vst.msk [vmem:[%s204 + $0x50] sm:$0xff] %vm720, %v692
      %732 = vst.msk [vmem:[%s204 + $0x58] sm:$0xff] %vm720, %v697
      %733 = vst.msk [vmem:[%s204 + $0x60] sm:$0xff] %vm720, %v702
      %734 = vst.msk [vmem:[%s204 + $0x68] sm:$0xff] %vm720, %v707
      %735 = vst.msk [vmem:[%s204 + $0x70] sm:$0xff] %vm720, %v712
      %736 = vst.msk [vmem:[%s204 + $0x78] sm:$0xff] %vm720, %v717
      %s737 = smul.u32 4, %s15
      %p738 = scmp.lt.s32.totalorder %s737, 7
      %s739 = scalar_select %p738, %s737, 7
      %s740 = smul.addr %s739, 4
      %s741 = smul.addr %s740, 8
      %s742 = scalar_lea.vmem %s4, %s741
      // Predicated region
      $region37: #{transition_forward.1} parent=35 // pred_check
        %p743 = pneg %p122
      $region38: #{transition_forward.1} parent=35 // pred_check_branch
        %745 = sbr.rel (%p743) target = $region40
      $region39: #{transition_forward.1} parent=35 // pred_region
        %s746 = smul.u32 4, %s15
      $region40: #{transition_forward.1} parent=35 // pred_fallthru
        _
    $region36: #{transition_forward.1} parent=5 // pred_fallthru
      _
    %p747 = scmp.le.s32.totalorder 2, %s10
    // Predicated region
    $region41: #{transition_forward.1} parent=5 // pred_check
      %p748 = pneg %p747
    $region42: #{transition_forward.1} parent=5 // pred_check_branch
      %750 = sbr.rel (%p748) target = $region44
    $region43: #{transition_forward.1} parent=5 // pred_region
      %s751 = ssub.s32 %s10, 2
      // Predicated region
      $region45: #{transition_forward.1} parent=43 // pred_check
        %p752 = pneg %p128
      $region46: #{transition_forward.1} parent=43 // pred_check_branch
        %754 = sbr.rel (%p752) target = $region48
      $region47: #{transition_forward.1} parent=43 // pred_region
        %s755 = smul.u32 4, %s16
        %p756 = scmp.lt.s32.totalorder %s755, 7
        %s757 = scalar_select %p756, %s755, 7
        %s758 = smul.addr %s757, 4
        %s759 = smul.addr %s758, 8
        %s760 = scalar_lea.vmem %s4, %s759
      $region48: #{transition_forward.1} parent=43 // pred_fallthru
        _
    $region44: #{transition_forward.1} parent=5 // pred_fallthru
      _
  $region6: #{transition_forward.1} parent=0 // loop_footer
    %s14 = sadd.s32 1, %s10
  $region7: #{transition_forward.1} parent=0 // loop_footer_branch
    %9 = sbr.rel target = $region3
  $region8: #{transition_forward.1} parent=0 // loop_exit
    _

</llo_original>
